<compile_context>
chip_gen: v7x
topology: tpu7x:2x2x1
jax: 0.10.0
libtpu: 0.0.40
codegen_flags: <defaults>
</compile_context>

<pallas_src>
import functools

import jax
import jax.numpy as jnp
from jax.experimental import pallas as pl
from jax.experimental.pallas import tpu as pltpu


# ----------------------------------------------------------------------------
# Helpers
# ----------------------------------------------------------------------------
def _round_up(x, m):
    return ((x + m - 1) // m) * m


def _vmem_capacity_bytes():
    try:
        return int(pltpu.get_tpu_info().vmem_capacity_bytes)
    except Exception:
        # Conservative fallback = v7x-sized VMEM; safe on every generation.
        return 64 << 20


_VMEM_CAPACITY = _vmem_capacity_bytes()
# Working budget for the pipelined tiles (leave room for double buffering,
# compiler internal scratch, semaphores, ...).
_VMEM_BUDGET = max(16 << 20, min(_VMEM_CAPACITY // 2 - (4 << 20), 96 << 20))


def _choose_tm(M):
    """Row-tile: multiple of 16 (bf16 sublane pack), minimal round-up waste."""
    if M <= 512:
        return _round_up(max(M, 1), 16)
    best_tm, best_pad = 128, _round_up(M, 128) - M
    for tm in (256, 512):
        pad = _round_up(M, tm) - M
        if pad <= best_pad:          # prefer larger tm on ties
            best_tm, best_pad = tm, pad
    return best_tm


def _choose_tiles(M, K_pad, N_pad, in_bytes, out_bytes, budget):
    """Returns (tm, tn, tk).  tk == K_pad means full-depth (no K grid axis)."""
    tm = _choose_tm(M)
    slack = 2 << 20

    # ---- preferred: full-K reduction, 2-D grid --------------------------
    # footprint ≈ 2*tm*K (x) + 2*K*tn (W) + 2*tm*tn (out) + bias + slack
    fixed = 2 * tm * K_pad * in_bytes + 2 * N_pad * 4 + slack
    denom = 2 * K_pad * in_bytes + 2 * tm * out_bytes
    avail = budget - fixed
    if avail >= denom * 128:
        tn = min(N_pad, (avail // denom) // 128 * 128)
        return tm, tn, K_pad

    # ---- fallback: split the K reduction (very large K) -----------------
    tn = 128
    fixed2 = 2 * tm * tn * out_bytes + tm * tn * 4 + 2 * tn * 4 + slack
    denom2 = 2 * (tm + tn) * in_bytes
    tk_max = max(256, (budget - fixed2) // denom2)
    # tk must evenly divide K_pad (K_pad is a multiple of 256 whenever this
    # path can be reached); take the largest 256-multiple divisor <= tk_max.
    tk = 256
    if K_pad % 256 == 0:
        q = K_pad // 256
        for d in range(1, q + 1):
            if q % d == 0 and 256 * d <= tk_max:
                tk = 256 * d
    else:
        tk = K_pad  # tiny K: full depth anyway
    return tm, tn, tk


# ----------------------------------------------------------------------------
# Kernels
# ----------------------------------------------------------------------------
def _linear_fullk_kernel(x_ref, w_ref, b_ref, o_ref):
    # One full-depth MXU dot per grid step; bias (1, tn) broadcasts over rows.
    o_ref[...] = (
        jnp.dot(x_ref[...], w_ref[...], preferred_element_type=jnp.float32)
        + b_ref[...]
    ).astype(o_ref.dtype)


def _linear_ksplit_kernel(x_ref, w_ref, b_ref, o_ref, acc_ref):
    k = pl.program_id(2)

    @pl.when(k == 0)
    def _():
        acc_ref[...] = jnp.zeros_like(acc_ref)

    acc_ref[...] += jnp.dot(
        x_ref[...], w_ref[...], preferred_element_type=jnp.float32
    )

    @pl.when(k == pl.num_programs(2) - 1)
    def _():
        o_ref[...] = (acc_ref[...] + b_ref[...]).astype(o_ref.dtype)


# ----------------------------------------------------------------------------
# One-time parameter preparation (keeps the weight-sized HBM pass off the
# per-call path).
# ----------------------------------------------------------------------------
def prepare_linear_params(w, b, compute_dtype=jnp.bfloat16):
    """Convert PyTorch-layout Linear params for the kernel, once.

    w: (out_features=N, in_features=K)   b: (N,)
    Returns (w_t_pad: (K_pad, N_pad) compute_dtype,
             b_pad:   (1, N_pad) float32,
             N)
    """
    N, K = w.shape
    N_pad = _round_up(N, 128)
    K_pad = _round_up(K, 256) if K >= 256 else _round_up(K, 16)
    w_t = jnp.asarray(w, dtype=jnp.float32).T
    w_t_pad = jnp.pad(w_t, ((0, K_pad - K), (0, N_pad - N))).astype(compute_dtype)
    b_pad = (
        jnp.pad(jnp.asarray(b, dtype=jnp.float32), (0, N_pad - N)).reshape(1, N_pad)
    )
    return w_t_pad, b_pad, N


# ----------------------------------------------------------------------------
# Forward wrapper
# ----------------------------------------------------------------------------
@functools.partial(jax.jit, static_argnames=("n_out", "out_dtype"))
def feature_extractor(x, w_t_pad, b_pad, *, n_out, out_dtype=jnp.float32):
    """y = x @ W^T + b  (nn.Linear forward).

    x:       (..., K) activations (any float dtype; cast to the weight dtype)
    w_t_pad: (K_pad, N_pad) pre-padded, pre-cast weights (prepare_linear_params)
    b_pad:   (1, N_pad) float32 bias
    Returns (..., n_out) in out_dtype.  Inputs are streamed in the weight
    dtype (bf16 by default); accumulation is float32.
    """
    orig_lead = x.shape[:-1]
    K = x.shape[-1]
    K_pad, N_pad = w_t_pad.shape
    assert K <= K_pad and b_pad.shape == (1, N_pad) and n_out <= N_pad

    compute_dtype = w_t_pad.dtype
    in_bytes = jnp.dtype(compute_dtype).itemsize
    out_bytes = jnp.dtype(out_dtype).itemsize

    x2 = x.reshape(-1, K)
    M = x2.shape[0]

    tm, tn, tk = _choose_tiles(M, K_pad, N_pad, in_bytes, out_bytes, _VMEM_BUDGET)
    M_pad = _round_up(max(M, 1), tm)

    # Only the (small) activation tensor is padded / cast per call.
    xp = jnp.pad(x2, ((0, M_pad - M), (0, K_pad - K))).astype(compute_dtype)

    M_steps = M_pad // tm
    N_steps = N_pad // tn

    if tk == K_pad:
        # Full-depth reduction, 2-D grid.  Put outermost the axis whose
        # operand re-stream is CHEAPER; the other operand's block index is
        # then constant across the inner axis, so Pallas DMAs it only once.
        extra_w = (M_steps - 1) * K_pad * N_pad    # W re-stream if M is outer
        extra_x = (N_steps - 1) * M_pad * K_pad    # x re-stream if N is outer
        if extra_x <= extra_w:
            grid = (N_steps, M_steps)              # N outer, M inner: W once
            x_spec = pl.BlockSpec((tm, K_pad), lambda j, i: (i, 0))
            w_spec = pl.BlockSpec((K_pad, tn), lambda j, i: (0, j))
            b_spec = pl.BlockSpec((1, tn), lambda j, i: (0, j))
            o_spec = pl.BlockSpec((tm, tn), lambda j, i: (i, j))
        else:
            grid = (M_steps, N_steps)              # M outer, N inner: x once
            x_spec = pl.BlockSpec((tm, K_pad), lambda i, j: (i, 0))
            w_spec = pl.BlockSpec((K_pad, tn), lambda i, j: (0, j))
            b_spec = pl.BlockSpec((1, tn), lambda i, j: (0, j))
            o_spec = pl.BlockSpec((tm, tn), lambda i, j: (i, j))
        kernel = _linear_fullk_kernel
        scratch = []
        semantics = ("parallel", "parallel")
        est = (2 * (tm * K_pad + K_pad * tn) * in_bytes
               + 2 * tm * tn * out_bytes + 2 * tn * 4)
    else:
        # Very large K: split the reduction, f32 accumulator scratch.
        K_steps = K_pad // tk
        grid = (M_steps, N_steps, K_steps)
        x_spec = pl.BlockSpec((tm, tk), lambda i, j, k: (i, k))
        w_spec = pl.BlockSpec((tk, tn), lambda i, j, k: (k, j))
        b_spec = pl.BlockSpec((1, tn), lambda i, j, k: (0, j))
        o_spec = pl.BlockSpec((tm, tn), lambda i, j, k: (i, j))
        kernel = _linear_ksplit_kernel
        scratch = [pltpu.VMEM((tm, tn), jnp.float32)]
        semantics = ("parallel", "parallel", "arbitrary")
        est = (2 * (tm * tk + tk * tn) * in_bytes
               + 2 * tm * tn * out_bytes + tm * tn * 4 + 2 * tn * 4)

    # Always set the scoped-VMEM limit explicitly (v5e's default is 16 MiB);
    # never exceed physical capacity (v7x: 64 MiB).
    vmem_limit = int(min(max(est * 1.4, 32 << 20), _VMEM_CAPACITY - (2 << 20)))

    out = pl.pallas_call(
        kernel,
        out_shape=jax.ShapeDtypeStruct((M_pad, N_pad), out_dtype),
        grid_spec=pltpu.PrefetchScalarGridSpec(
            num_scalar_prefetch=0,
            grid=grid,
            in_specs=[x_spec, w_spec, b_spec],
            out_specs=o_spec,
            scratch_shapes=scratch,
        ),
        compiler_params=pltpu.CompilerParams(
            dimension_semantics=semantics,
            vmem_limit_bytes=vmem_limit,
        ),
    )(xp, w_t_pad, b_pad)

    return out[:M, :n_out].reshape(*orig_lead, n_out)


# ----------------------------------------------------------------------------
# Demo / self-test
# ----------------------------------------------------------------------------
if __name__ == "__main__":
    # Small shapes consistent with the module's forward (Linear on last dim).
    batch = 8
    input_dim = 256    # stands in for the default 1280
    output_dim = 512   # stands in for the default 4096

    key = jax.random.PRNGKey(0)
    kx, kw, kb = jax.random.split(key, 3)

    x = jax.random.normal(kx, (batch, input_dim), dtype=jnp.float32)

    # Deterministic init mirroring nn.Linear's uniform(-1/sqrt(fan_in), ...)
    bound = 1.0 / (input_dim ** 0.5)
    w = jax.random.uniform(
        kw, (output_dim, input_dim), dtype=jnp.float32, minval=-bound, maxval=bound
    )  # PyTorch layout (out_features, in_features)
    b = jax.random.uniform(
        kb, (output_dim,), dtype=jnp.float32, minval=-bound, maxval=bound
    )

    # One-time weight preparation (bf16 cast + padding happen here, not per call).
    w_t_pad, b_pad, n_out = prepare_linear_params(w, b)

    y = feature_extractor(x, w_t_pad, b_pad, n_out=n_out)
    y = jax.block_until_ready(y)
    assert y.shape == (batch, output_dim)

    # Reference with the same bf16-rounded inputs + f32 accumulation.
    x_r = x.astype(jnp.bfloat16).astype(jnp.float32)
    w_r = w.T.astype(jnp.bfloat16).astype(jnp.float32)
    y_ref = x_r @ w_r + b
    assert jnp.allclose(y, y_ref, atol=2e-3, rtol=2e-3)

    # Sanity vs full-f32 math (loose tolerance for the bf16 input rounding).
    y_ref_f32 = x @ w.T + b
    assert jnp.allclose(y, y_ref_f32, atol=5e-2, rtol=5e-2)

    print("KERNEL_OK")
</pallas_src>

<mosaic_0001>
module attributes {stable_mosaic.version = 11 : i64} {
  func.func @_linear_fullk_kernel(%arg0: i32, %arg1: i32, %arg2: memref<16x256xbf16, #tpu.memory_space<vmem>>, %arg3: memref<256x512xbf16, #tpu.memory_space<vmem>>, %arg4: memref<1x512xf32, #tpu.memory_space<vmem>>, %arg5: memref<16x512xf32, #tpu.memory_space<vmem>>) attributes {dimension_semantics = [#tpu.dimension_semantics<parallel>, #tpu.dimension_semantics<parallel>], iteration_bounds = array<i64: 1, 1>, scalar_prefetch = 0 : i64, scratch_operands = 0 : i64, tpu.core_type = #tpu.core_type<tc>, window_params = [{transform_indices = @transform_0, window_bounds = array<i64: 16, 256>}, {transform_indices = @transform_1, window_bounds = array<i64: 256, 512>}, {transform_indices = @transform_2, window_bounds = array<i64: 1, 512>}, {transform_indices = @transform_3, window_bounds = array<i64: 16, 512>}]} {
    %c0 = arith.constant 0 : index
    %c0_0 = arith.constant 0 : index
    %0 = vector.load %arg2[%c0, %c0_0] : memref<16x256xbf16, #tpu.memory_space<vmem>>, vector<16x256xbf16>
    %c0_1 = arith.constant 0 : index
    %c0_2 = arith.constant 0 : index
    %1 = vector.load %arg3[%c0_1, %c0_2] : memref<256x512xbf16, #tpu.memory_space<vmem>>, vector<256x512xbf16>
    %cst = arith.constant dense<0.000000e+00> : vector<16x512xf32>
    %2 = tpu.matmul %0, %1, %cst {dimension_numbers = #tpu.dot_dimension_numbers<[1], [0], [0], [1], [0, 0, 1, 1], [], []>} : vector<16x256xbf16>, vector<256x512xbf16>, vector<16x512xf32> -> vector<16x512xf32>
    %c0_3 = arith.constant 0 : index
    %c0_4 = arith.constant 0 : index
    %3 = vector.load %arg4[%c0_3, %c0_4] : memref<1x512xf32, #tpu.memory_space<vmem>>, vector<1x512xf32>
    %4 = vector.broadcast %3 : vector<1x512xf32> to vector<16x512xf32>
    %5 = arith.addf %2, %4 : vector<16x512xf32>
    %c0_5 = arith.constant 0 : index
    %c0_6 = arith.constant 0 : index
    %6 = vector.load %arg5[%c0_5, %c0_6] : memref<16x512xf32, #tpu.memory_space<vmem>>, vector<16x512xf32>
    tpu.vector_store %arg5[%c0_5, %c0_6], %5 {strides = array<i32>} : memref<16x512xf32, #tpu.memory_space<vmem>>, vector<16x512xf32>,
    return
  }
  func.func @transform_0(%arg0: i32, %arg1: i32) -> (i32, i32) {
    %c0_i32 = arith.constant 0 : i32
    %c0_i32_0 = arith.constant 0 : i32
    return %arg1, %c0_i32 : i32, i32
  }
  func.func @transform_1(%arg0: i32, %arg1: i32) -> (i32, i32) {
    %c0_i32 = arith.constant 0 : i32
    %c0_i32_0 = arith.constant 0 : i32
    return %c0_i32, %arg0 : i32, i32
  }
  func.func @transform_2(%arg0: i32, %arg1: i32) -> (i32, i32) {
    %c0_i32 = arith.constant 0 : i32
    %c0_i32_0 = arith.constant 0 : i32
    return %c0_i32, %arg0 : i32, i32
  }
  func.func @transform_3(%arg0: i32, %arg1: i32) -> (i32, i32) {
    %c0_i32 = arith.constant 0 : i32
    return %arg1, %arg0 : i32, i32
  }
}

</mosaic_0001>

<llo_original>
// kernel: feature_extractor.1
$region0: #{feature_extractor.1}
  #allocation0 [shape = 'u32[]', space=smem, size = 0x4, offset = 0x4, fixed_abs, tag = 'smem constant byte address 0x4 - core index']
  #allocation1 [shape = 'u32[144,128]{1,0:T(1,128)}', space=vmem, size = 0x12000, scoped, tag = 'internal scratch']
  %s0 = inlined_call_operand.vmem [shape: bf16[16,256], index: 0, kind: input, shape index: {}]
  %s1 = inlined_call_operand.hbm [shape: bf16[256,512], index: 1, kind: input, shape index: {}]
  %s2 = inlined_call_operand.vmem [shape: f32[1,512], index: 2, kind: input, shape index: {}]
  %s3 = inlined_call_operand.vmem [shape: f32[16,512], index: 3, kind: output, shape index: {}]
  %s4 = sld [smem:[#allocation0]]
  $region26: #{feature_extractor.1} parent=0
    _
  %s6 = ssub.s32 1, %s4
  %s7 = scalar_select 0, %s6, %s4
  $region1: #{feature_extractor.1} parent=0
    #allocation2 [shape = 'u8[262144]{0}', space=vmem, size = 0x40000, scoped, tag = 'input window, operand 1, single buffered']
    #allocation3 [shape = 's32[1]{0}', space=sflag, size = 0x4, scoped, tag = 'scoped memory for feature_extractor.1']
    %8 = vsyncpa [#allocation3], 0
    // Predicated region
    $region2: #{feature_extractor.1} parent=1 // pred_check
      _
    $region3: #{feature_extractor.1} parent=1 // pred_check_branch
      %10 = sbr.rel (0) target = $region5
    $region4: #{feature_extractor.1} parent=1 // pred_region
      _
    $region5: #{feature_extractor.1} parent=1 // pred_fallthru
      _
    // Predicated region
    $region6: #{feature_extractor.1} parent=1 // pred_check
      _
    $region7: #{feature_extractor.1} parent=1 // pred_check_branch
      %12 = sbr.rel (0) target = $region9
    $region8: #{feature_extractor.1} parent=1 // pred_region
      %s14 = ssub.s32 8192, 8192
      %15 = vsyncadd [#allocation3], %s14
      %s16 = sshll.u32 [#allocation2], 4
      %s17 = int_to_ptr.vmem [resolvable:$true] %s16
      %22 = dma.hbm_to_vmem [thread:$0]  %s1, 8192, %s17, [#allocation3], 256, 256, 16
    $region9: #{feature_extractor.1} parent=1 // pred_fallthru
      _
    // Predicated region
    $region10: #{feature_extractor.1} parent=1 // pred_check
      _
    $region11: #{feature_extractor.1} parent=1 // pred_check_branch
      %24 = sbr.rel (0) target = $region13
    $region12: #{feature_extractor.1} parent=1 // pred_region
      _
    $region13: #{feature_extractor.1} parent=1 // pred_fallthru
      _
    // Predicated region
    $region14: #{feature_extractor.1} parent=1 // pred_check
      _
    $region15: #{feature_extractor.1} parent=1 // pred_check_branch
      %26 = sbr.rel (0) target = $region17
    $region16: #{feature_extractor.1} parent=1 // pred_region
      %27 = dma.done [#allocation3], 8192
    $region17: #{feature_extractor.1} parent=1 // pred_fallthru
      _
    %v28 = vld [vmem:[%s0] sm:$0xff]
    %v29 = vld [vmem:[%s0 + $0x8] sm:$0xff]
    %v30 = vld [vmem:[#allocation2] sm:$0xff]
    %v31 = vld [vmem:[#allocation2 + $0x8] sm:$0xff]
    %v32 = vld [vmem:[#allocation2 + $0x10] sm:$0xff]
    %v33 = vld [vmem:[#allocation2 + $0x18] sm:$0xff]
    %v34 = vld [vmem:[#allocation2 + $0x20] sm:$0xff]
    %v35 = vld [vmem:[#allocation2 + $0x28] sm:$0xff]
    %v36 = vld [vmem:[#allocation2 + $0x30] sm:$0xff]
    %v37 = vld [vmem:[#allocation2 + $0x38] sm:$0xff]
    %v38 = vld [vmem:[#allocation2 + $0x40] sm:$0xff]
    %v39 = vld [vmem:[#allocation2 + $0x48] sm:$0xff]
    %v40 = vld [vmem:[#allocation2 + $0x50] sm:$0xff]
    %v41 = vld [vmem:[#allocation2 + $0x58] sm:$0xff]
    %v42 = vld [vmem:[#allocation2 + $0x60] sm:$0xff]
    %v43 = vld [vmem:[#allocation2 + $0x68] sm:$0xff]
    %v44 = vld [vmem:[#allocation2 + $0x70] sm:$0xff]
    %v45 = vld [vmem:[#allocation2 + $0x78] sm:$0xff]
    %v46 = vld [vmem:[#allocation2 + $0x80] sm:$0xff]
    %v47 = vld [vmem:[#allocation2 + $0x88] sm:$0xff]
    %v48 = vld [vmem:[#allocation2 + $0x90] sm:$0xff]
    %v49 = vld [vmem:[#allocation2 + $0x98] sm:$0xff]
    %v50 = vld [vmem:[#allocation2 + $0xa0] sm:$0xff]
    %v51 = vld [vmem:[#allocation2 + $0xa8] sm:$0xff]
    %v52 = vld [vmem:[#allocation2 + $0xb0] sm:$0xff]
    %v53 = vld [vmem:[#allocation2 + $0xb8] sm:$0xff]
    %v54 = vld [vmem:[#allocation2 + $0xc0] sm:$0xff]
    %v55 = vld [vmem:[#allocation2 + $0xc8] sm:$0xff]
    %v56 = vld [vmem:[#allocation2 + $0xd0] sm:$0xff]
    %v57 = vld [vmem:[#allocation2 + $0xd8] sm:$0xff]
    %v58 = vld [vmem:[#allocation2 + $0xe0] sm:$0xff]
    %v59 = vld [vmem:[#allocation2 + $0xe8] sm:$0xff]
    %v60 = vld [vmem:[#allocation2 + $0xf0] sm:$0xff]
    %v61 = vld [vmem:[#allocation2 + $0xf8] sm:$0xff]
    %v62 = vld [vmem:[#allocation2 + $0x100] sm:$0xff]
    %v63 = vld [vmem:[#allocation2 + $0x108] sm:$0xff]
    %v64 = vld [vmem:[#allocation2 + $0x110] sm:$0xff]
    %v65 = vld [vmem:[#allocation2 + $0x118] sm:$0xff]
    %v66 = vld [vmem:[#allocation2 + $0x120] sm:$0xff]
    %v67 = vld [vmem:[#allocation2 + $0x128] sm:$0xff]
    %v68 = vld [vmem:[#allocation2 + $0x130] sm:$0xff]
    %v69 = vld [vmem:[#allocation2 + $0x138] sm:$0xff]
    %v70 = vld [vmem:[#allocation2 + $0x140] sm:$0xff]
    %v71 = vld [vmem:[#allocation2 + $0x148] sm:$0xff]
    %v72 = vld [vmem:[#allocation2 + $0x150] sm:$0xff]
    %v73 = vld [vmem:[#allocation2 + $0x158] sm:$0xff]
    %v74 = vld [vmem:[#allocation2 + $0x160] sm:$0xff]
    %v75 = vld [vmem:[#allocation2 + $0x168] sm:$0xff]
    %v76 = vld [vmem:[#allocation2 + $0x170] sm:$0xff]
    %v77 = vld [vmem:[#allocation2 + $0x178] sm:$0xff]
    %v78 = vld [vmem:[#allocation2 + $0x180] sm:$0xff]
    %v79 = vld [vmem:[#allocation2 + $0x188] sm:$0xff]
    %v80 = vld [vmem:[#allocation2 + $0x190] sm:$0xff]
    %v81 = vld [vmem:[#allocation2 + $0x198] sm:$0xff]
    %v82 = vld [vmem:[#allocation2 + $0x1a0] sm:$0xff]
    %v83 = vld [vmem:[#allocation2 + $0x1a8] sm:$0xff]
    %v84 = vld [vmem:[#allocation2 + $0x1b0] sm:$0xff]
    %v85 = vld [vmem:[#allocation2 + $0x1b8] sm:$0xff]
    %v86 = vld [vmem:[#allocation2 + $0x1c0] sm:$0xff]
    %v87 = vld [vmem:[#allocation2 + $0x1c8] sm:$0xff]
    %v88 = vld [vmem:[#allocation2 + $0x1d0] sm:$0xff]
    %v89 = vld [vmem:[#allocation2 + $0x1d8] sm:$0xff]
    %v90 = vld [vmem:[#allocation2 + $0x1e0] sm:$0xff]
    %v91 = vld [vmem:[#allocation2 + $0x1e8] sm:$0xff]
    %v92 = vld [vmem:[#allocation2 + $0x1f0] sm:$0xff]
    %v93 = vld [vmem:[#allocation2 + $0x1f8] sm:$0xff]
    %v94 = vld [vmem:[%s2] sm:$0xf]
    %v96 = vlaneseq
    %v97 = vshrl.u32 %v96, 7
    %v98 = vsub.s32 0, %v97
    %v99 = vrot.slane %v94, %v98
    %v100 = vlaneseq
    %v101 = vshrl.u32 %v100, 7
    %v102 = vsub.s32 1, %v101
    %v103 = vrot.slane %v94, %v102
    %v104 = vlaneseq
    %v105 = vshrl.u32 %v104, 7
    %v106 = vsub.s32 2, %v105
    %v107 = vrot.slane %v94, %v106
    %v108 = vlaneseq
    %v109 = vshrl.u32 %v108, 7
    %v110 = vsub.s32 3, %v109
    %v111 = vrot.slane %v94, %v110
    %v118 = vunpack.c.l.b16 %v28
    %v119 = vunpack.c.h.b16 %v28
    %v120 = vunpack.c.l.b16 %v29
    %v121 = vunpack.c.h.b16 %v29
    %v122 = vpack.c.b16 %v120, %v118
    %v123 = vpack.c.b16 %v121, %v119
    %v190 = vunpack.c.l.b16 %v30
    %v191 = vunpack.c.h.b16 %v30
    %v192 = vunpack.c.l.b16 %v31
    %v193 = vunpack.c.h.b16 %v31
    %v194 = vunpack.c.l.b16 %v32
    %v195 = vunpack.c.h.b16 %v32
    %v196 = vunpack.c.l.b16 %v33
    %v197 = vunpack.c.h.b16 %v33
    %v198 = vunpack.c.l.b16 %v34
    %v199 = vunpack.c.h.b16 %v34
    %v200 = vunpack.c.l.b16 %v35
    %v201 = vunpack.c.h.b16 %v35
    %v202 = vunpack.c.l.b16 %v36
    %v203 = vunpack.c.h.b16 %v36
    %v204 = vunpack.c.l.b16 %v37
    %v205 = vunpack.c.h.b16 %v37
    %v206 = vunpack.c.l.b16 %v38
    %v207 = vunpack.c.h.b16 %v38
    %v208 = vunpack.c.l.b16 %v39
    %v209 = vunpack.c.h.b16 %v39
    %v210 = vunpack.c.l.b16 %v40
    %v211 = vunpack.c.h.b16 %v40
    %v212 = vunpack.c.l.b16 %v41
    %v213 = vunpack.c.h.b16 %v41
    %v214 = vunpack.c.l.b16 %v42
    %v215 = vunpack.c.h.b16 %v42
    %v216 = vunpack.c.l.b16 %v43
    %v217 = vunpack.c.h.b16 %v43
    %v218 = vunpack.c.l.b16 %v44
    %v219 = vunpack.c.h.b16 %v44
    %v220 = vunpack.c.l.b16 %v45
    %v221 = vunpack.c.h.b16 %v45
    %v222 = vunpack.c.l.b16 %v46
    %v223 = vunpack.c.h.b16 %v46
    %v224 = vunpack.c.l.b16 %v47
    %v225 = vunpack.c.h.b16 %v47
    %v226 = vunpack.c.l.b16 %v48
    %v227 = vunpack.c.h.b16 %v48
    %v228 = vunpack.c.l.b16 %v49
    %v229 = vunpack.c.h.b16 %v49
    %v230 = vunpack.c.l.b16 %v50
    %v231 = vunpack.c.h.b16 %v50
    %v232 = vunpack.c.l.b16 %v51
    %v233 = vunpack.c.h.b16 %v51
    %v234 = vunpack.c.l.b16 %v52
    %v235 = vunpack.c.h.b16 %v52
    %v236 = vunpack.c.l.b16 %v53
    %v237 = vunpack.c.h.b16 %v53
    %v238 = vunpack.c.l.b16 %v54
    %v239 = vunpack.c.h.b16 %v54
    %v240 = vunpack.c.l.b16 %v55
    %v241 = vunpack.c.h.b16 %v55
    %v242 = vunpack.c.l.b16 %v56
    %v243 = vunpack.c.h.b16 %v56
    %v244 = vunpack.c.l.b16 %v57
    %v245 = vunpack.c.h.b16 %v57
    %v246 = vunpack.c.l.b16 %v58
    %v247 = vunpack.c.h.b16 %v58
    %v248 = vunpack.c.l.b16 %v59
    %v249 = vunpack.c.h.b16 %v59
    %v250 = vunpack.c.l.b16 %v60
    %v251 = vunpack.c.h.b16 %v60
    %v252 = vunpack.c.l.b16 %v61
    %v253 = vunpack.c.h.b16 %v61
    %v254 = vunpack.c.l.b16 %v62
    %v255 = vunpack.c.h.b16 %v62
    %v256 = vunpack.c.l.b16 %v63
    %v257 = vunpack.c.h.b16 %v63
    %v258 = vunpack.c.l.b16 %v64
    %v259 = vunpack.c.h.b16 %v64
    %v260 = vunpack.c.l.b16 %v65
    %v261 = vunpack.c.h.b16 %v65
    %v262 = vunpack.c.l.b16 %v66
    %v263 = vunpack.c.h.b16 %v66
    %v264 = vunpack.c.l.b16 %v67
    %v265 = vunpack.c.h.b16 %v67
    %v266 = vunpack.c.l.b16 %v68
    %v267 = vunpack.c.h.b16 %v68
    %v268 = vunpack.c.l.b16 %v69
    %v269 = vunpack.c.h.b16 %v69
    %v270 = vunpack.c.l.b16 %v70
    %v271 = vunpack.c.h.b16 %v70
    %v272 = vunpack.c.l.b16 %v71
    %v273 = vunpack.c.h.b16 %v71
    %v274 = vunpack.c.l.b16 %v72
    %v275 = vunpack.c.h.b16 %v72
    %v276 = vunpack.c.l.b16 %v73
    %v277 = vunpack.c.h.b16 %v73
    %v278 = vunpack.c.l.b16 %v74
    %v279 = vunpack.c.h.b16 %v74
    %v280 = vunpack.c.l.b16 %v75
    %v281 = vunpack.c.h.b16 %v75
    %v282 = vunpack.c.l.b16 %v76
    %v283 = vunpack.c.h.b16 %v76
    %v284 = vunpack.c.l.b16 %v77
    %v285 = vunpack.c.h.b16 %v77
    %v286 = vunpack.c.l.b16 %v78
    %v287 = vunpack.c.h.b16 %v78
    %v288 = vunpack.c.l.b16 %v79
    %v289 = vunpack.c.h.b16 %v79
    %v290 = vunpack.c.l.b16 %v80
    %v291 = vunpack.c.h.b16 %v80
    %v292 = vunpack.c.l.b16 %v81
    %v293 = vunpack.c.h.b16 %v81
    %v294 = vunpack.c.l.b16 %v82
    %v295 = vunpack.c.h.b16 %v82
    %v296 = vunpack.c.l.b16 %v83
    %v297 = vunpack.c.h.b16 %v83
    %v298 = vunpack.c.l.b16 %v84
    %v299 = vunpack.c.h.b16 %v84
    %v300 = vunpack.c.l.b16 %v85
    %v301 = vunpack.c.h.b16 %v85
    %v302 = vunpack.c.l.b16 %v86
    %v303 = vunpack.c.h.b16 %v86
    %v304 = vunpack.c.l.b16 %v87
    %v305 = vunpack.c.h.b16 %v87
    %v306 = vunpack.c.l.b16 %v88
    %v307 = vunpack.c.h.b16 %v88
    %v308 = vunpack.c.l.b16 %v89
    %v309 = vunpack.c.h.b16 %v89
    %v310 = vunpack.c.l.b16 %v90
    %v311 = vunpack.c.h.b16 %v90
    %v312 = vunpack.c.l.b16 %v91
    %v313 = vunpack.c.h.b16 %v91
    %v314 = vunpack.c.l.b16 %v92
    %v315 = vunpack.c.h.b16 %v92
    %v316 = vunpack.c.l.b16 %v93
    %v317 = vunpack.c.h.b16 %v93
    %v318 = vpack.c.b16 %v194, %v190
    %v319 = vpack.c.b16 %v195, %v191
    %v320 = vpack.c.b16 %v196, %v192
    %v321 = vpack.c.b16 %v197, %v193
    %v322 = vpack.c.b16 %v202, %v198
    %v323 = vpack.c.b16 %v203, %v199
    %v324 = vpack.c.b16 %v204, %v200
    %v325 = vpack.c.b16 %v205, %v201
    %v326 = vpack.c.b16 %v210, %v206
    %v327 = vpack.c.b16 %v211, %v207
    %v328 = vpack.c.b16 %v212, %v208
    %v329 = vpack.c.b16 %v213, %v209
    %v330 = vpack.c.b16 %v218, %v214
    %v331 = vpack.c.b16 %v219, %v215
    %v332 = vpack.c.b16 %v220, %v216
    %v333 = vpack.c.b16 %v221, %v217
    %v334 = vpack.c.b16 %v226, %v222
    %v335 = vpack.c.b16 %v227, %v223
    %v336 = vpack.c.b16 %v228, %v224
    %v337 = vpack.c.b16 %v229, %v225
    %v338 = vpack.c.b16 %v234, %v230
    %v339 = vpack.c.b16 %v235, %v231
    %v340 = vpack.c.b16 %v236, %v232
    %v341 = vpack.c.b16 %v237, %v233
    %v342 = vpack.c.b16 %v242, %v238
    %v343 = vpack.c.b16 %v243, %v239
    %v344 = vpack.c.b16 %v244, %v240
    %v345 = vpack.c.b16 %v245, %v241
    %v346 = vpack.c.b16 %v250, %v246
    %v347 = vpack.c.b16 %v251, %v247
    %v348 = vpack.c.b16 %v252, %v248
    %v349 = vpack.c.b16 %v253, %v249
    %v350 = vpack.c.b16 %v258, %v254
    %v351 = vpack.c.b16 %v259, %v255
    %v352 = vpack.c.b16 %v260, %v256
    %v353 = vpack.c.b16 %v261, %v257
    %v354 = vpack.c.b16 %v266, %v262
    %v355 = vpack.c.b16 %v267, %v263
    %v356 = vpack.c.b16 %v268, %v264
    %v357 = vpack.c.b16 %v269, %v265
    %v358 = vpack.c.b16 %v274, %v270
    %v359 = vpack.c.b16 %v275, %v271
    %v360 = vpack.c.b16 %v276, %v272
    %v361 = vpack.c.b16 %v277, %v273
    %v362 = vpack.c.b16 %v282, %v278
    %v363 = vpack.c.b16 %v283, %v279
    %v364 = vpack.c.b16 %v284, %v280
    %v365 = vpack.c.b16 %v285, %v281
    %v366 = vpack.c.b16 %v290, %v286
    %v367 = vpack.c.b16 %v291, %v287
    %v368 = vpack.c.b16 %v292, %v288
    %v369 = vpack.c.b16 %v293, %v289
    %v370 = vpack.c.b16 %v298, %v294
    %v371 = vpack.c.b16 %v299, %v295
    %v372 = vpack.c.b16 %v300, %v296
    %v373 = vpack.c.b16 %v301, %v297
    %v374 = vpack.c.b16 %v306, %v302
    %v375 = vpack.c.b16 %v307, %v303
    %v376 = vpack.c.b16 %v308, %v304
    %v377 = vpack.c.b16 %v309, %v305
    %v378 = vpack.c.b16 %v314, %v310
    %v379 = vpack.c.b16 %v315, %v311
    %v380 = vpack.c.b16 %v316, %v312
    %v381 = vpack.c.b16 %v317, %v313
    %446 = vmatprep.subr.bf16.mxu0 %v319
    %447 = vmatpush1.bf16.msra.mxu0 %v318
    %448 = vmatprep.subr.bf16.mxu0 %v323
    %449 = vmatpush1.bf16.msra.mxu0 %v322
    %450 = vmatprep.subr.bf16.mxu0 %v327
    %451 = vmatpush1.bf16.msra.mxu0 %v326
    %452 = vmatprep.subr.bf16.mxu0 %v331
    %453 = vmatpush1.bf16.msra.mxu0 %v330
    %454 = vmatprep.subr.bf16.mxu0 %v335
    %455 = vmatpush1.bf16.msra.mxu0 %v334
    %456 = vmatprep.subr.bf16.mxu0 %v339
    %457 = vmatpush1.bf16.msra.mxu0 %v338
    %458 = vmatprep.subr.bf16.mxu0 %v343
    %459 = vmatpush1.bf16.msra.mxu0 %v342
    %460 = vmatprep.subr.bf16.mxu0 %v347
    %461 = vmatpush1.bf16.msra.mxu0 %v346
    %462 = vmatprep.subr.bf16.mxu0 %v351
    %463 = vmatpush1.bf16.msra.mxu0 %v350
    %464 = vmatprep.subr.bf16.mxu0 %v355
    %465 = vmatpush1.bf16.msra.mxu0 %v354
    %466 = vmatprep.subr.bf16.mxu0 %v359
    %467 = vmatpush1.bf16.msra.mxu0 %v358
    %468 = vmatprep.subr.bf16.mxu0 %v363
    %469 = vmatpush1.bf16.msra.mxu0 %v362
    %470 = vmatprep.subr.bf16.mxu0 %v367
    %471 = vmatpush1.bf16.msra.mxu0 %v366
    %472 = vmatprep.subr.bf16.mxu0 %v371
    %473 = vmatpush1.bf16.msra.mxu0 %v370
    %474 = vmatprep.subr.bf16.mxu0 %v375
    %475 = vmatpush1.bf16.msra.mxu0 %v374
    %476 = vmatprep.subr.bf16.mxu0 %v379
    %477 = vmatpush1.bf16.msra.mxu0 %v378
    %478 = vmatprep.mubr.bf16.mxu0 %v123
    %479 = vmatmul.mubr.bf16.gmra.mrb[0].mxu0 %v122
    %v480 = vpop.f32.mrb[0].mxu0
    %v481 = vadd.f32 %v99, %v480
    %v482 = vpop.f32.mrb[0].mxu0
    %v483 = vadd.f32 %v103, %v482
    %v484 = vpop.f32.mrb[0].mxu0
    %v485 = vadd.f32 %v99, %v484
    %v486 = vpop.f32.mrb[0].mxu0
    %v487 = vadd.f32 %v103, %v486
    %488 = vdwg.mxu0
    %489 = vmatprep.subr.bf16.mxu0 %v321
    %490 = vmatpush1.bf16.msra.mxu0 %v320
    %491 = vmatprep.subr.bf16.mxu0 %v325
    %492 = vmatpush1.bf16.msra.mxu0 %v324
    %493 = vmatprep.subr.bf16.mxu0 %v329
    %494 = vmatpush1.bf16.msra.mxu0 %v328
    %495 = vmatprep.subr.bf16.mxu0 %v333
    %496 = vmatpush1.bf16.msra.mxu0 %v332
    %497 = vmatprep.subr.bf16.mxu0 %v337
    %498 = vmatpush1.bf16.msra.mxu0 %v336
    %499 = vmatprep.subr.bf16.mxu0 %v341
    %500 = vmatpush1.bf16.msra.mxu0 %v340
    %501 = vmatprep.subr.bf16.mxu0 %v345
    %502 = vmatpush1.bf16.msra.mxu0 %v344
    %503 = vmatprep.subr.bf16.mxu0 %v349
    %504 = vmatpush1.bf16.msra.mxu0 %v348
    %505 = vmatprep.subr.bf16.mxu0 %v353
    %506 = vmatpush1.bf16.msra.mxu0 %v352
    %507 = vmatprep.subr.bf16.mxu0 %v357
    %508 = vmatpush1.bf16.msra.mxu0 %v356
    %509 = vmatprep.subr.bf16.mxu0 %v361
    %510 = vmatpush1.bf16.msra.mxu0 %v360
    %511 = vmatprep.subr.bf16.mxu0 %v365
    %512 = vmatpush1.bf16.msra.mxu0 %v364
    %513 = vmatprep.subr.bf16.mxu0 %v369
    %514 = vmatpush1.bf16.msra.mxu0 %v368
    %515 = vmatprep.subr.bf16.mxu0 %v373
    %516 = vmatpush1.bf16.msra.mxu0 %v372
    %517 = vmatprep.subr.bf16.mxu0 %v377
    %518 = vmatpush1.bf16.msra.mxu0 %v376
    %519 = vmatprep.subr.bf16.mxu0 %v381
    %520 = vmatpush1.bf16.msra.mxu0 %v380
    %521 = vmatprep.mubr.bf16.mxu0 %v123
    %522 = vmatmul.mubr.bf16.gmra.mrb[0].mxu0 %v122
    %v523 = vpop.f32.mrb[0].mxu0
    %v524 = vadd.f32 %v107, %v523
    %v525 = vpop.f32.mrb[0].mxu0
    %v526 = vadd.f32 %v111, %v525
    %v527 = vpop.f32.mrb[0].mxu0
    %v528 = vadd.f32 %v107, %v527
    %v529 = vpop.f32.mrb[0].mxu0
    %v530 = vadd.f32 %v111, %v529
    %531 = vdwg.mxu0
    %532 = vst [vmem:[%s3] sm:$0xff] %v481
    %533 = vst [vmem:[%s3 + $0x8] sm:$0xff] %v483
    %534 = vst [vmem:[%s3 + $0x10] sm:$0xff] %v524
    %535 = vst [vmem:[%s3 + $0x18] sm:$0xff] %v526
    %536 = vst [vmem:[%s3 + $0x20] sm:$0xff] %v485
    %537 = vst [vmem:[%s3 + $0x28] sm:$0xff] %v487
    %538 = vst [vmem:[%s3 + $0x30] sm:$0xff] %v528
    %539 = vst [vmem:[%s3 + $0x38] sm:$0xff] %v530
    // Predicated region
    $region18: #{feature_extractor.1} parent=1 // pred_check
      _
    $region19: #{feature_extractor.1} parent=1 // pred_check_branch
      %541 = sbr.rel (0) target = $region21
    $region20: #{feature_extractor.1} parent=1 // pred_region
      _
    $region21: #{feature_extractor.1} parent=1 // pred_fallthru
      _
    // Predicated region
    $region22: #{feature_extractor.1} parent=1 // pred_check
      _
    $region23: #{feature_extractor.1} parent=1 // pred_check_branch
      %543 = sbr.rel (0) target = $region25
    $region24: #{feature_extractor.1} parent=1 // pred_region
      _
    $region25: #{feature_extractor.1} parent=1 // pred_fallthru
      _
    %544 = vsyncpa [#allocation3], 1

</llo_original>
